<compile_context>
chip_gen: v6e
topology: v6e:2x2x1
jax: 0.10.0
libtpu: 0.0.40
codegen_flags: <defaults>
</compile_context>

<pallas_src>
import jax
import jax.numpy as jnp
from jax.experimental import pallas as pl
from jax.experimental.pallas import tpu as pltpu


LANE = 128      # vreg lane width   (batch lives on lanes in this kernel)
SUBLANE = 8     # vreg sublane width (features live on sublanes)


def _round_up(n, m):
    return ((n + m - 1) // m) * m


# ---------------------------------------------------------------------------
# Kernel: feature-major fused 3-layer MLP with gaussian gate.
# All activations are (features, batch_tile): fully lane-dense vregs for the
# exp + 2x tanh transcendental passes and the gate VPU math.
# ---------------------------------------------------------------------------
def custom_nn_kernel(xT_ref, w0t_ref, gate_ref, w1t_ref, b1_ref, wot_ref,
                     bo_ref, oT_ref):
    xT = xT_ref[...]                               # (n_in, tb)

    b0 = gate_ref[:, 0:1]                          # (h0, 1) column broadcasts
    mu = gate_ref[:, 1:2]
    neg_inv_sig2 = gate_ref[:, 2:3]                # -1/sigma^2 (precomputed)

    # layers[0]: Linear(n_in, h0)   ->  hT (h0, tb)
    h = jnp.dot(w0t_ref[...], xT, preferred_element_type=jnp.float32) + b0

    # i == 0 branch: gaussian gate  h * exp(-(h - mu)^2 / sigma^2)
    d = h - mu
    h = h * jnp.exp(d * d * neg_inv_sig2)

    # layers[1]: Tanh
    h = jnp.tanh(h)

    # layers[2]: Linear(h0, h1)  +  layers[3]: Tanh
    h = jnp.tanh(jnp.dot(w1t_ref[...], h, preferred_element_type=jnp.float32)
                 + b1_ref[...])

    # fc_out: Linear(h1, n_out).  Rows [n_out:n_out_p) of wot/bo are exactly
    # zero (pack_params invariant) and are sliced off in the wrapper.
    oT_ref[...] = (jnp.dot(wot_ref[...], h, preferred_element_type=jnp.float32)
                   + bo_ref[...])


def pack_params(params):
    """One-time packing of the PyTorch-style parameters into kernel operands.

    Invariant: rows [n_out:n_out_p) of wot_p and bo_p are EXACTLY zero so the
    padded output rows sliced off by the wrapper never contain garbage.
    """
    w0, b0, mu, sigma, w1, b1, wo, bo = params
    h0 = w0.shape[1]
    h1 = w1.shape[1]
    n_out = wo.shape[1]

    # Clamp sigma so -1/sigma^2 can never become -inf (0 * -inf -> NaN gate).
    sigma = jnp.maximum(jnp.abs(sigma.astype(jnp.float32)), 1e-6)
    neg_inv_sig2 = -1.0 / (sigma * sigma)

    # Gate params as (h0, 3) columns [b0 | mu | -1/sigma^2] for feature-major
    # column broadcasts inside the kernel.
    gate = jnp.stack(
        [b0.reshape(h0), mu.reshape(h0), neg_inv_sig2.reshape(h0)], axis=1
    ).astype(jnp.float32)                                     # (h0, 3)

    n_out_p = _round_up(n_out, SUBLANE)                       # sublane-aligned

    w0t = w0.T.astype(jnp.float32)                            # (h0, n_in)
    w1t = w1.T.astype(jnp.float32)                            # (h1, h0)
    b1c = b1.reshape(h1, 1).astype(jnp.float32)               # (h1, 1)
    wot_p = (jnp.zeros((n_out_p, h1), jnp.float32)
             .at[:n_out, :].set(wo.T.astype(jnp.float32)))    # (n_out_p, h1)
    bo_p = (jnp.zeros((n_out_p, 1), jnp.float32)
            .at[:n_out, 0].set(bo.reshape(n_out).astype(jnp.float32)))

    packed = (w0t, gate, w1t, b1c, wot_p, bo_p)
    return packed, n_out


def _choose_batch_tiling(batch, block_batch):
    """Pick (batch_tile, grid) over the lane (batch) axis.

    Tiny batches run as one step (dispatch-bound regime; a block whose last
    dim equals the full array dim is always legal).  Larger batches use
    lane-aligned tiles and at least two grid steps so both v7x TensorCores
    get work via dimension_semantics=("parallel",).
    """
    if batch <= 2 * LANE:
        return batch, 1
    grid_b = max(2, pl.cdiv(batch, block_batch))
    tb = _round_up(pl.cdiv(batch, grid_b), LANE)
    grid_b = pl.cdiv(batch, tb)
    return tb, grid_b


def custom_nn_forward(x, packed, n_out, block_batch=4096):
    w0t, gate, w1t, b1c, wot_p, bo_p = packed
    batch, n_in = x.shape
    h0 = w0t.shape[0]
    h1 = w1t.shape[0]
    n_out_p = wot_p.shape[0]

    if x.dtype != jnp.float32:
        x = x.astype(jnp.float32)

    tb, grid_b = _choose_batch_tiling(batch, block_batch)
    padded_batch = grid_b * tb

    xT = x.T                                                  # (n_in, batch)
    if padded_batch != batch:
        xT = jnp.pad(xT, ((0, 0), (0, padded_batch - batch)))

    cost = pl.CostEstimate(
        flops=2 * padded_batch * (n_in * h0 + h0 * h1 + h1 * n_out_p),
        transcendentals=padded_batch * (2 * h0 + h1),         # exp + 2x tanh
        bytes_accessed=4 * (n_in * padded_batch + n_out_p * padded_batch
                            + w0t.size + gate.size + w1t.size + b1c.size
                            + wot_p.size + bo_p.size),
    )

    outT = pl.pallas_call(
        custom_nn_kernel,
        out_shape=jax.ShapeDtypeStruct((n_out_p, padded_batch), jnp.float32),
        grid=(grid_b,),
        in_specs=[
            pl.BlockSpec((n_in, tb), lambda i: (0, i)),       # xT: tiled (lanes)
            pl.BlockSpec((h0, n_in), lambda i: (0, 0)),       # w0T: resident
            pl.BlockSpec((h0, 3), lambda i: (0, 0)),          # [b0|mu|-1/sig^2]
            pl.BlockSpec((h1, h0), lambda i: (0, 0)),         # w1T: resident
            pl.BlockSpec((h1, 1), lambda i: (0, 0)),          # b1 column
            pl.BlockSpec((n_out_p, h1), lambda i: (0, 0)),    # fc_out^T (padded)
            pl.BlockSpec((n_out_p, 1), lambda i: (0, 0)),     # bo column (padded)
        ],
        out_specs=pl.BlockSpec((n_out_p, tb), lambda i: (0, i)),
        compiler_params=pltpu.CompilerParams(
            dimension_semantics=("parallel",),                # megacore on v7x
        ),
        cost_estimate=cost,
    )(xT, w0t, gate, w1t, b1c, wot_p, bo_p)

    # Slice off the zero-weight padded rows / padded batch and return the
    # module's (batch, n_out) orientation (fuses under jit).
    return outT[:n_out, :batch].T


def custom_nn_reference(x, params):
    """Pure-JAX reference of the same forward pass (full f32 matmuls)."""
    w0, b0, mu, sigma, w1, b1, wo, bo = params
    hp = jax.lax.Precision.HIGHEST
    h = jnp.dot(x, w0, precision=hp) + b0
    h = h * jnp.exp(-((h - mu) ** 2) / (sigma ** 2))
    h = jnp.tanh(h)
    h = jnp.tanh(jnp.dot(h, w1, precision=hp) + b1)
    return jnp.dot(h, wo, precision=hp) + bo


def init_params(key, n_input, hidden_units, n_output):
    """Deterministic parameter init (uniform, PyTorch-Linear-style scaling)."""
    h0, h1 = hidden_units
    ks = jax.random.split(key, 6)

    def lin(kw, kb, fan_in, fan_out):
        bound = 1.0 / jnp.sqrt(jnp.float32(fan_in))
        w = jax.random.uniform(kw, (fan_in, fan_out), jnp.float32, -bound, bound)
        b = jax.random.uniform(kb, (1, fan_out), jnp.float32, -bound, bound)
        return w, b

    w0, b0 = lin(ks[0], ks[1], n_input, h0)
    w1, b1 = lin(ks[2], ks[3], h0, h1)
    wo, bo = lin(ks[4], ks[5], h1, n_output)

    mu = jnp.linspace(0.0, 2.0, h0, dtype=jnp.float32).reshape(1, h0)
    sigma = jnp.ones((1, h0), jnp.float32) * 0.1

    return (w0, b0, mu, sigma, w1, b1, wo, bo)


if __name__ == "__main__":
    n_input = 4
    hidden_units = [32, 32]
    n_output = 2
    batch = 8

    key = jax.random.PRNGKey(0)
    k_x, k_p = jax.random.split(key)
    x = jax.random.normal(k_x, (batch, n_input), dtype=jnp.float32)
    params = init_params(k_p, n_input, hidden_units, n_output)

    packed, n_out = pack_params(params)

    # jit the wrapper so the transpose/pad/slice plumbing fuses with the call.
    fwd = jax.jit(lambda xx: custom_nn_forward(xx, packed, n_out))
    out = jax.block_until_ready(fwd(x))

    ref = custom_nn_reference(x, params)
    assert out.shape == (batch, n_output), out.shape
    # Both sides now run full-f32 matmuls; the sharp gaussian gate (sigma=0.1)
    # can amplify f32 rounding by up to ~1e2, hence 1e-4 rather than 1e-5.
    err = float(jnp.max(jnp.abs(out - ref)))
    assert jnp.allclose(out, ref, atol=1e-4, rtol=1e-4), err

    print("KERNEL_OK")
</pallas_src>

<mosaic_0001>
module attributes {stable_mosaic.version = 11 : i64} {
  func.func @custom_nn_kernel(%arg0: i32, %arg1: memref<4x8xf32, #tpu.memory_space<vmem>>, %arg2: memref<32x4xf32, #tpu.memory_space<vmem>>, %arg3: memref<32x3xf32, #tpu.memory_space<vmem>>, %arg4: memref<32x32xf32, #tpu.memory_space<vmem>>, %arg5: memref<32x1xf32, #tpu.memory_space<vmem>>, %arg6: memref<8x32xf32, #tpu.memory_space<vmem>>, %arg7: memref<8x1xf32, #tpu.memory_space<vmem>>, %arg8: memref<8x8xf32, #tpu.memory_space<vmem>>) attributes {dimension_semantics = [#tpu.dimension_semantics<parallel>], iteration_bounds = array<i64: 1>, scalar_prefetch = 0 : i64, scratch_operands = 0 : i64, tpu.core_type = #tpu.core_type<tc>, window_params = [{transform_indices = @transform_0, window_bounds = array<i64: 4, 8>}, {pipeline_mode = #tpu.pipeline_mode<synchronous>, transform_indices = @transform_1, window_bounds = array<i64: 32, 4>}, {pipeline_mode = #tpu.pipeline_mode<synchronous>, transform_indices = @transform_2, window_bounds = array<i64: 32, 3>}, {pipeline_mode = #tpu.pipeline_mode<synchronous>, transform_indices = @transform_3, window_bounds = array<i64: 32, 32>}, {pipeline_mode = #tpu.pipeline_mode<synchronous>, transform_indices = @transform_4, window_bounds = array<i64: 32, 1>}, {pipeline_mode = #tpu.pipeline_mode<synchronous>, transform_indices = @transform_5, window_bounds = array<i64: 8, 32>}, {pipeline_mode = #tpu.pipeline_mode<synchronous>, transform_indices = @transform_6, window_bounds = array<i64: 8, 1>}, {transform_indices = @transform_7, window_bounds = array<i64: 8, 8>}]} {
    %c0 = arith.constant 0 : index
    %c0_0 = arith.constant 0 : index
    %0 = vector.load %arg1[%c0, %c0_0] : memref<4x8xf32, #tpu.memory_space<vmem>>, vector<4x8xf32>
    %c0_1 = arith.constant 0 : index
    %c0_2 = arith.constant 0 : index
    %1 = vector.load %arg3[%c0_1, %c0_2] : memref<32x3xf32, #tpu.memory_space<vmem>>, vector<32x1xf32>
    %c0_3 = arith.constant 0 : index
    %c1 = arith.constant 1 : index
    %2 = vector.load %arg3[%c0_3, %c1] : memref<32x3xf32, #tpu.memory_space<vmem>>, vector<32x1xf32>
    %c0_4 = arith.constant 0 : index
    %c2 = arith.constant 2 : index
    %3 = vector.load %arg3[%c0_4, %c2] : memref<32x3xf32, #tpu.memory_space<vmem>>, vector<32x1xf32>
    %c0_5 = arith.constant 0 : index
    %c0_6 = arith.constant 0 : index
    %4 = vector.load %arg2[%c0_5, %c0_6] : memref<32x4xf32, #tpu.memory_space<vmem>>, vector<32x4xf32>
    %cst = arith.constant dense<0.000000e+00> : vector<32x8xf32>
    %5 = tpu.matmul %4, %0, %cst {dimension_numbers = #tpu.dot_dimension_numbers<[1], [0], [0], [1], [0, 0, 1, 1], [], []>} : vector<32x4xf32>, vector<4x8xf32>, vector<32x8xf32> -> vector<32x8xf32>
    %6 = vector.broadcast %1 : vector<32x1xf32> to vector<32x8xf32>
    %7 = arith.addf %5, %6 : vector<32x8xf32>
    %8 = vector.broadcast %2 : vector<32x1xf32> to vector<32x8xf32>
    %9 = arith.subf %7, %8 : vector<32x8xf32>
    %10 = arith.mulf %9, %9 : vector<32x8xf32>
    %11 = vector.broadcast %3 : vector<32x1xf32> to vector<32x8xf32>
    %12 = arith.mulf %10, %11 : vector<32x8xf32>
    %13 = math.exp %12 : vector<32x8xf32>
    %14 = arith.mulf %7, %13 : vector<32x8xf32>
    %15 = math.tanh %14 : vector<32x8xf32>
    %c0_7 = arith.constant 0 : index
    %c0_8 = arith.constant 0 : index
    %16 = vector.load %arg4[%c0_7, %c0_8] : memref<32x32xf32, #tpu.memory_space<vmem>>, vector<32x32xf32>
    %cst_9 = arith.constant dense<0.000000e+00> : vector<32x8xf32>
    %17 = tpu.matmul %16, %15, %cst_9 {dimension_numbers = #tpu.dot_dimension_numbers<[1], [0], [0], [1], [0, 0, 1, 1], [], []>} : vector<32x32xf32>, vector<32x8xf32>, vector<32x8xf32> -> vector<32x8xf32>
    %c0_10 = arith.constant 0 : index
    %c0_11 = arith.constant 0 : index
    %18 = vector.load %arg5[%c0_10, %c0_11] : memref<32x1xf32, #tpu.memory_space<vmem>>, vector<32x1xf32>
    %19 = vector.broadcast %18 : vector<32x1xf32> to vector<32x8xf32>
    %20 = arith.addf %17, %19 : vector<32x8xf32>
    %21 = math.tanh %20 : vector<32x8xf32>
    %c0_12 = arith.constant 0 : index
    %c0_13 = arith.constant 0 : index
    %22 = vector.load %arg6[%c0_12, %c0_13] : memref<8x32xf32, #tpu.memory_space<vmem>>, vector<8x32xf32>
    %cst_14 = arith.constant dense<0.000000e+00> : vector<8x8xf32>
    %23 = tpu.matmul %22, %21, %cst_14 {dimension_numbers = #tpu.dot_dimension_numbers<[1], [0], [0], [1], [0, 0, 1, 1], [], []>} : vector<8x32xf32>, vector<32x8xf32>, vector<8x8xf32> -> vector<8x8xf32>
    %c0_15 = arith.constant 0 : index
    %c0_16 = arith.constant 0 : index
    %24 = vector.load %arg7[%c0_15, %c0_16] : memref<8x1xf32, #tpu.memory_space<vmem>>, vector<8x1xf32>
    %25 = vector.broadcast %24 : vector<8x1xf32> to vector<8x8xf32>
    %26 = arith.addf %23, %25 : vector<8x8xf32>
    %c0_17 = arith.constant 0 : index
    %c0_18 = arith.constant 0 : index
    %27 = vector.load %arg8[%c0_17, %c0_18] : memref<8x8xf32, #tpu.memory_space<vmem>>, vector<8x8xf32>
    tpu.vector_store %arg8[%c0_17, %c0_18], %26 {strides = array<i32>} : memref<8x8xf32, #tpu.memory_space<vmem>>, vector<8x8xf32>,
    return
  }
  func.func @transform_0(%arg0: i32) -> (i32, i32) {
    %c0_i32 = arith.constant 0 : i32
    %c0_i32_0 = arith.constant 0 : i32
    return %c0_i32, %arg0 : i32, i32
  }
  func.func @transform_1(%arg0: i32) -> (i32, i32) {
    %c0_i32 = arith.constant 0 : i32
    %c0_i32_0 = arith.constant 0 : i32
    %c0_i32_1 = arith.constant 0 : i32
    return %c0_i32, %c0_i32_0 : i32, i32
  }
  func.func @transform_2(%arg0: i32) -> (i32, i32) {
    %c0_i32 = arith.constant 0 : i32
    %c0_i32_0 = arith.constant 0 : i32
    %c0_i32_1 = arith.constant 0 : i32
    return %c0_i32, %c0_i32_0 : i32, i32
  }
  func.func @transform_3(%arg0: i32) -> (i32, i32) {
    %c0_i32 = arith.constant 0 : i32
    %c0_i32_0 = arith.constant 0 : i32
    %c0_i32_1 = arith.constant 0 : i32
    return %c0_i32, %c0_i32_0 : i32, i32
  }
  func.func @transform_4(%arg0: i32) -> (i32, i32) {
    %c0_i32 = arith.constant 0 : i32
    %c0_i32_0 = arith.constant 0 : i32
    %c0_i32_1 = arith.constant 0 : i32
    return %c0_i32, %c0_i32_0 : i32, i32
  }
  func.func @transform_5(%arg0: i32) -> (i32, i32) {
    %c0_i32 = arith.constant 0 : i32
    %c0_i32_0 = arith.constant 0 : i32
    %c0_i32_1 = arith.constant 0 : i32
    return %c0_i32, %c0_i32_0 : i32, i32
  }
  func.func @transform_6(%arg0: i32) -> (i32, i32) {
    %c0_i32 = arith.constant 0 : i32
    %c0_i32_0 = arith.constant 0 : i32
    %c0_i32_1 = arith.constant 0 : i32
    return %c0_i32, %c0_i32_0 : i32, i32
  }
  func.func @transform_7(%arg0: i32) -> (i32, i32) {
    %c0_i32 = arith.constant 0 : i32
    %c0_i32_0 = arith.constant 0 : i32
    return %c0_i32, %arg0 : i32, i32
  }
}

</mosaic_0001>

<llo_original>
// kernel: _lambda_.1
$region0: #{_lambda_.1}
  #allocation0 [shape = 'u32[]', space=smem, size = 0x4, offset = 0x4, fixed_abs, tag = 'smem constant byte address 0x4 - core index']
  #allocation1 [shape = 'u32[144,128]{1,0:T(1,128)}', space=vmem, size = 0x12000, scoped, tag = 'internal scratch']
  %s0 = inlined_call_operand.hbm [shape: f32[4,8], index: 0, kind: input, shape index: {}]
  %s1 = inlined_call_operand.hbm [shape: f32[32,4], index: 1, kind: input, shape index: {}]
  %s2 = inlined_call_operand.hbm [shape: f32[32,3], index: 2, kind: input, shape index: {}]
  %s3 = inlined_call_operand.hbm [shape: f32[32,32], index: 3, kind: input, shape index: {}]
  %s4 = inlined_call_operand.hbm [shape: f32[32,1], index: 4, kind: input, shape index: {}]
  %s5 = inlined_call_operand.hbm [shape: f32[8,32], index: 5, kind: input, shape index: {}]
  %s6 = inlined_call_operand.vmem [shape: f32[8,1], index: 6, kind: input, shape index: {}]
  %s7 = inlined_call_operand.vmem [shape: f32[8,8], index: 7, kind: output, shape index: {}]
  %s8 = sld [smem:[#allocation0]]
  $region62: #{_lambda_.1} parent=0
    _
  %s10 = ssub.s32 1, %s8
  %s11 = scalar_select 0, %s10, %s8
  $region1: #{_lambda_.1} parent=0
    #allocation2 [shape = 'u8[2048]{0}', space=vmem, size = 0x800, scoped, tag = 'input window, operand 0, single buffered']
    #allocation3 [shape = 's32[1]{0}', space=sflag, size = 0x4, scoped, tag = 'scoped memory for _lambda_.1']
    #allocation4 [shape = 'u8[16384]{0}', space=vmem, size = 0x4000, scoped, tag = 'input window, operand 1, single buffered']
    #allocation5 [shape = 's32[1]{0}', space=sflag, size = 0x4, scoped, tag = 'scoped memory for _lambda_.1']
    #allocation6 [shape = 'u8[16384]{0}', space=vmem, size = 0x4000, scoped, tag = 'input window, operand 2, single buffered']
    #allocation7 [shape = 'u8[16384]{0}', space=vmem, size = 0x4000, scoped, tag = 'input window, operand 3, single buffered']
    #allocation8 [shape = 's32[1]{0}', space=sflag, size = 0x4, scoped, tag = 'scoped memory for _lambda_.1']
    #allocation9 [shape = 'u8[16384]{0}', space=vmem, size = 0x4000, scoped, tag = 'input window, operand 4, single buffered']
    #allocation10 [shape = 'u8[4096]{0}', space=vmem, size = 0x1000, scoped, tag = 'input window, operand 5, single buffered']
    #allocation11 [shape = 's32[1]{0}', space=sflag, size = 0x4, scoped, tag = 'scoped memory for _lambda_.1']
    %12 = vsyncpa [#allocation3], 0
    %13 = vsyncpa [#allocation5], 0
    %14 = vsyncpa [#allocation8], 0
    %15 = vsyncpa [#allocation11], 0
    // Predicated region
    $region2: #{_lambda_.1} parent=1 // pred_check
      _
    $region3: #{_lambda_.1} parent=1 // pred_check_branch
      %17 = sbr.rel (0) target = $region5
    $region4: #{_lambda_.1} parent=1 // pred_region
      %s19 = ssub.s32 64, 64
      %20 = vsyncadd [#allocation3], %s19
      %s22 = sshll.u32 [#allocation2], 4
      %s23 = int_to_ptr.vmem [resolvable:$true] %s22
      %25 = dma.hbm_to_vmem [thread:$0]  %s0, 64, %s23, [#allocation3]
    $region5: #{_lambda_.1} parent=1 // pred_fallthru
      _
    // Predicated region
    $region6: #{_lambda_.1} parent=1 // pred_check
      _
    $region7: #{_lambda_.1} parent=1 // pred_check_branch
      %27 = sbr.rel (0) target = $region9
    $region8: #{_lambda_.1} parent=1 // pred_region
      %s29 = ssub.s32 512, 512
      %30 = vsyncadd [#allocation5], %s29
      %s31 = sshll.u32 [#allocation4], 4
      %s32 = int_to_ptr.vmem [resolvable:$true] %s31
      %37 = dma.hbm_to_vmem [thread:$0]  %s1, 512, %s32, [#allocation5], 128, 128, 8
    $region9: #{_lambda_.1} parent=1 // pred_fallthru
      _
    // Predicated region
    $region10: #{_lambda_.1} parent=1 // pred_check
      _
    $region11: #{_lambda_.1} parent=1 // pred_check_branch
      %39 = sbr.rel (0) target = $region13
    $region12: #{_lambda_.1} parent=1 // pred_region
      %s41 = ssub.s32 512, 512
      %42 = vsyncadd [#allocation5], %s41
      %s43 = sshll.u32 [#allocation6], 4
      %s44 = int_to_ptr.vmem [resolvable:$true] %s43
      %49 = dma.hbm_to_vmem [thread:$0]  %s2, 512, %s44, [#allocation5], 128, 128, 8
    $region13: #{_lambda_.1} parent=1 // pred_fallthru
      _
    // Predicated region
    $region14: #{_lambda_.1} parent=1 // pred_check
      _
    $region15: #{_lambda_.1} parent=1 // pred_check_branch
      %51 = sbr.rel (0) target = $region17
    $region16: #{_lambda_.1} parent=1 // pred_region
      %s53 = ssub.s32 512, 512
      %54 = vsyncadd [#allocation8], %s53
      %s55 = sshll.u32 [#allocation7], 4
      %s56 = int_to_ptr.vmem [resolvable:$true] %s55
      %61 = dma.hbm_to_vmem [thread:$0]  %s3, 512, %s56, [#allocation8], 128, 128, 8
    $region17: #{_lambda_.1} parent=1 // pred_fallthru
      _
    // Predicated region
    $region18: #{_lambda_.1} parent=1 // pred_check
      _
    $region19: #{_lambda_.1} parent=1 // pred_check_branch
      %63 = sbr.rel (0) target = $region21
    $region20: #{_lambda_.1} parent=1 // pred_region
      %s65 = ssub.s32 512, 512
      %66 = vsyncadd [#allocation8], %s65
      %s67 = sshll.u32 [#allocation9], 4
      %s68 = int_to_ptr.vmem [resolvable:$true] %s67
      %73 = dma.hbm_to_vmem [thread:$0]  %s4, 512, %s68, [#allocation8], 128, 128, 8
    $region21: #{_lambda_.1} parent=1 // pred_fallthru
      _
    // Predicated region
    $region22: #{_lambda_.1} parent=1 // pred_check
      _
    $region23: #{_lambda_.1} parent=1 // pred_check_branch
      %75 = sbr.rel (0) target = $region25
    $region24: #{_lambda_.1} parent=1 // pred_region
      %s77 = ssub.s32 128, 128
      %78 = vsyncadd [#allocation11], %s77
      %s80 = sshll.u32 [#allocation10], 4
      %s81 = int_to_ptr.vmem [resolvable:$true] %s80
      %83 = dma.hbm_to_vmem [thread:$0]  %s5, 128, %s81, [#allocation11]
    $region25: #{_lambda_.1} parent=1 // pred_fallthru
      _
    // Predicated region
    $region26: #{_lambda_.1} parent=1 // pred_check
      _
    $region27: #{_lambda_.1} parent=1 // pred_check_branch
      %85 = sbr.rel (0) target = $region29
    $region28: #{_lambda_.1} parent=1 // pred_region
      _
    $region29: #{_lambda_.1} parent=1 // pred_fallthru
      _
    // Predicated region
    $region30: #{_lambda_.1} parent=1 // pred_check
      _
    $region31: #{_lambda_.1} parent=1 // pred_check_branch
      %87 = sbr.rel (0) target = $region33
    $region32: #{_lambda_.1} parent=1 // pred_region
      %88 = dma.done [#allocation3], 64
    $region33: #{_lambda_.1} parent=1 // pred_fallthru
      _
    // Predicated region
    $region34: #{_lambda_.1} parent=1 // pred_check
      _
    $region35: #{_lambda_.1} parent=1 // pred_check_branch
      %90 = sbr.rel (0) target = $region37
    $region36: #{_lambda_.1} parent=1 // pred_region
      %91 = dma.done [#allocation5], 512
    $region37: #{_lambda_.1} parent=1 // pred_fallthru
      _
    // Predicated region
    $region38: #{_lambda_.1} parent=1 // pred_check
      _
    $region39: #{_lambda_.1} parent=1 // pred_check_branch
      %93 = sbr.rel (0) target = $region41
    $region40: #{_lambda_.1} parent=1 // pred_region
      %94 = dma.done [#allocation5], 512
    $region41: #{_lambda_.1} parent=1 // pred_fallthru
      _
    // Predicated region
    $region42: #{_lambda_.1} parent=1 // pred_check
      _
    $region43: #{_lambda_.1} parent=1 // pred_check_branch
      %96 = sbr.rel (0) target = $region45
    $region44: #{_lambda_.1} parent=1 // pred_region
      %97 = dma.done [#allocation8], 512
    $region45: #{_lambda_.1} parent=1 // pred_fallthru
      _
    // Predicated region
    $region46: #{_lambda_.1} parent=1 // pred_check
      _
    $region47: #{_lambda_.1} parent=1 // pred_check_branch
      %99 = sbr.rel (0) target = $region49
    $region48: #{_lambda_.1} parent=1 // pred_region
      %100 = dma.done [#allocation8], 512
    $region49: #{_lambda_.1} parent=1 // pred_fallthru
      _
    // Predicated region
    $region50: #{_lambda_.1} parent=1 // pred_check
      _
    $region51: #{_lambda_.1} parent=1 // pred_check_branch
      %102 = sbr.rel (0) target = $region53
    $region52: #{_lambda_.1} parent=1 // pred_region
      %103 = dma.done [#allocation11], 128
    $region53: #{_lambda_.1} parent=1 // pred_fallthru
      _
    %v104 = vld [vmem:[#allocation2] sm:$0xf]
    %v105 = vld [vmem:[#allocation6] sm:$0xff]
    %v106 = vld [vmem:[#allocation6 + $0x8] sm:$0xff]
    %v107 = vld [vmem:[#allocation6 + $0x10] sm:$0xff]
    %v108 = vld [vmem:[#allocation6 + $0x18] sm:$0xff]
    %v109 = vld [vmem:[#allocation4] sm:$0xff]
    %v110 = vld [vmem:[#allocation4 + $0x8] sm:$0xff]
    %v111 = vld [vmem:[#allocation4 + $0x10] sm:$0xff]
    %v112 = vld [vmem:[#allocation4 + $0x18] sm:$0xff]
    %114 = vset.pattern.permute.xlu0 0
    %115 = vperm.xlu0 %114, %v105
    %v116 = vpop.permute.xlu0 %115
    %119 = vset.pattern.permute.xlu0 0
    %120 = vperm.xlu0 %119, %v106
    %v121 = vpop.permute.xlu0 %120
    %124 = vset.pattern.permute.xlu0 0
    %125 = vperm.xlu0 %124, %v107
    %v126 = vpop.permute.xlu0 %125
    %129 = vset.pattern.permute.xlu0 0
    %130 = vperm.xlu0 %129, %v108
    %v131 = vpop.permute.xlu0 %130
    %vm133 = vcmask 31744
    %v135 = vsel %vm133, %v109, 0
    %v138 = vsel %vm133, %v110, 0
    %v141 = vsel %vm133, %v111, 0
    %v144 = vsel %vm133, %v112, 0
    %vm146 = vcmask 1043456
    %v148 = vsel %vm146, %v104, 0
    %150 = vmatprep.subr.mxu0 0.0
    %151 = vmatpush1.msra.mxu0 0.0
    %152 = vmatprep.subr.mxu0 0.0
    %153 = vmatpush1.msra.mxu0 0.0
    %154 = vmatprep.subr.mxu0 0.0
    %155 = vmatpush1.msra.mxu0 0.0
    %156 = vmatprep.subr.mxu0 0.0
    %157 = vmatpush1.msra.mxu0 0.0
    %158 = vmatprep.subr.mxu0 0.0
    %159 = vmatpush1.msra.mxu0 0.0
    %160 = vmatprep.subr.mxu0 0.0
    %161 = vmatpush1.msra.mxu0 0.0
    %162 = vmatprep.subr.mxu0 0.0
    %163 = vmatpush1.msra.mxu0 0.0
    %164 = vmatprep.subr.mxu0 0.0
    %165 = vmatpush1.msra.mxu0 0.0
    %166 = vmatprep.subr.mxu0 0.0
    %167 = vmatpush1.msra.mxu0 0.0
    %168 = vmatprep.subr.mxu0 0.0
    %169 = vmatpush1.msra.mxu0 0.0
    %170 = vmatprep.subr.mxu0 0.0
    %171 = vmatpush1.msra.mxu0 0.0
    %172 = vmatprep.subr.mxu0 0.0
    %173 = vmatpush1.msra.mxu0 0.0
    %174 = vmatprep.subr.mxu0 0.0
    %175 = vmatpush1.msra.mxu0 0.0
    %176 = vmatprep.subr.mxu0 0.0
    %177 = vmatpush1.msra.mxu0 0.0
    %178 = vmatprep.subr.mxu0 0.0
    %179 = vmatpush1.msra.mxu0 0.0
    %180 = vmatprep.subr.mxu0 0.0
    %181 = vmatpush1.msra.mxu0 %v148
    %182 = vmatprep.subr.mxu0 0.0
    %183 = vmatpush2.msra.mxu0 0.0
    %184 = vmatprep.subr.mxu0 0.0
    %185 = vmatpush2.msra.mxu0 0.0
    %186 = vmatprep.subr.mxu0 0.0
    %187 = vmatpush2.msra.mxu0 0.0
    %188 = vmatprep.subr.mxu0 0.0
    %189 = vmatpush2.msra.mxu0 0.0
    %190 = vmatprep.subr.mxu0 0.0
    %191 = vmatpush2.msra.mxu0 0.0
    %192 = vmatprep.subr.mxu0 0.0
    %193 = vmatpush2.msra.mxu0 0.0
    %194 = vmatprep.subr.mxu0 0.0
    %195 = vmatpush2.msra.mxu0 0.0
    %196 = vmatprep.subr.mxu0 0.0
    %197 = vmatpush2.msra.mxu0 0.0
    %198 = vmatprep.subr.mxu0 0.0
    %199 = vmatpush2.msra.mxu0 0.0
    %200 = vmatprep.subr.mxu0 0.0
    %201 = vmatpush2.msra.mxu0 0.0
    %202 = vmatprep.subr.mxu0 0.0
    %203 = vmatpush2.msra.mxu0 0.0
    %204 = vmatprep.subr.mxu0 0.0
    %205 = vmatpush2.msra.mxu0 0.0
    %206 = vmatprep.subr.mxu0 0.0
    %207 = vmatpush2.msra.mxu0 0.0
    %208 = vmatprep.subr.mxu0 0.0
    %209 = vmatpush2.msra.mxu0 0.0
    %210 = vmatprep.subr.mxu0 0.0
    %211 = vmatpush2.msra.mxu0 0.0
    %212 = vmatprep.subr.mxu0 0.0
    %213 = vmatpush2.msra.mxu0 0.0
    %214 = vmatprep.mubr.f32.mxu0 0.0
    %215 = vmatmul.mubr.f32.gmra.mxu0 %v135
    %v216 = vpop.f32.mrf.mxu0
    %v217 = vadd.f32 %v116, %v216
    %v218 = vpop.f32.mrf.mxu0
    %219 = vmatprep.mubr.f32.mxu0 0.0
    %220 = vmatmul.mubr.f32.gmra.mxu0 %v138
    %v221 = vpop.f32.mrf.mxu0
    %v222 = vadd.f32 %v121, %v221
    %v223 = vpop.f32.mrf.mxu0
    %224 = vmatprep.mubr.f32.mxu0 0.0
    %225 = vmatmul.mubr.f32.gmra.mxu0 %v141
    %v226 = vpop.f32.mrf.mxu0
    %v227 = vadd.f32 %v126, %v226
    %v228 = vpop.f32.mrf.mxu0
    %229 = vmatprep.mubr.f32.mxu0 0.0
    %230 = vmatmul.mubr.f32.gmra.mxu0 %v144
    %v231 = vpop.f32.mrf.mxu0
    %v232 = vadd.f32 %v131, %v231
    %v233 = vpop.f32.mrf.mxu0
    %234 = vdwg.mxu0
    %235 = vset.pattern.permute.xlu0 1
    %236 = vperm.xlu0 %235, %v105
    %v237 = vpop.permute.xlu0 %236
    %239 = vset.pattern.permute.xlu0 1
    %240 = vperm.xlu0 %239, %v106
    %v241 = vpop.permute.xlu0 %240
    %243 = vset.pattern.permute.xlu0 1
    %244 = vperm.xlu0 %243, %v107
    %v245 = vpop.permute.xlu0 %244
    %247 = vset.pattern.permute.xlu0 1
    %248 = vperm.xlu0 %247, %v108
    %v249 = vpop.permute.xlu0 %248
    %v251 = vsub.f32 %v217, %v237
    %v252 = vsub.f32 %v222, %v241
    %v253 = vsub.f32 %v227, %v245
    %v254 = vsub.f32 %v232, %v249
    %v255 = vmul.f32 %v251, %v251
    %v256 = vmul.f32 %v252, %v252
    %v257 = vmul.f32 %v253, %v253
    %v258 = vmul.f32 %v254, %v254
    %259 = vset.pattern.permute.xlu0 2
    %260 = vperm.xlu0 %259, %v105
    %v261 = vpop.permute.xlu0 %260
    %263 = vset.pattern.permute.xlu0 2
    %264 = vperm.xlu0 %263, %v106
    %v265 = vpop.permute.xlu0 %264
    %267 = vset.pattern.permute.xlu0 2
    %268 = vperm.xlu0 %267, %v107
    %v269 = vpop.permute.xlu0 %268
    %271 = vset.pattern.permute.xlu0 2
    %272 = vperm.xlu0 %271, %v108
    %v273 = vpop.permute.xlu0 %272
    %v275 = vmul.f32 %v255, %v261
    %v276 = vmul.f32 %v256, %v265
    %v277 = vmul.f32 %v257, %v269
    %v278 = vmul.f32 %v258, %v273
    %v279 = vmul.f32 %v275, 1.442695
    %v280 = vpow.pop %v279
    %v281 = vmul.f32 %v276, 1.442695
    %v282 = vpow.pop %v281
    %v283 = vmul.f32 %v277, 1.442695
    %v284 = vpow.pop %v283
    %v285 = vmul.f32 %v278, 1.442695
    %v286 = vpow.pop %v285
    %v287 = vmul.f32 %v217, %v280
    %v288 = vmul.f32 %v222, %v282
    %v289 = vmul.f32 %v227, %v284
    %v290 = vmul.f32 %v232, %v286
    %v291 = vtanh.pop %v287
    %v292 = vtanh.pop %v288
    %v293 = vtanh.pop %v289
    %v294 = vtanh.pop %v290
    %v295 = vld [vmem:[#allocation7] sm:$0xff]
    %v296 = vld [vmem:[#allocation7 + $0x8] sm:$0xff]
    %v297 = vld [vmem:[#allocation7 + $0x10] sm:$0xff]
    %v298 = vld [vmem:[#allocation7 + $0x18] sm:$0xff]
    %v299 = vld [vmem:[#allocation9] sm:$0xff]
    %v300 = vld [vmem:[#allocation9 + $0x8] sm:$0xff]
    %v301 = vld [vmem:[#allocation9 + $0x10] sm:$0xff]
    %v302 = vld [vmem:[#allocation9 + $0x18] sm:$0xff]
    %304 = vset.pattern.permute.xlu0 0
    %305 = vperm.xlu0 %304, %v299
    %v306 = vpop.permute.xlu0 %305
    %309 = vset.pattern.permute.xlu0 0
    %310 = vperm.xlu0 %309, %v300
    %v311 = vpop.permute.xlu0 %310
    %314 = vset.pattern.permute.xlu0 0
    %315 = vperm.xlu0 %314, %v301
    %v316 = vpop.permute.xlu0 %315
    %319 = vset.pattern.permute.xlu0 0
    %320 = vperm.xlu0 %319, %v302
    %v321 = vpop.permute.xlu0 %320
    %vm323 = vcmask 261120
    %v325 = vsel %vm323, %v295, 0
    %v328 = vsel %vm323, %v296, 0
    %v331 = vsel %vm323, %v297, 0
    %v334 = vsel %vm323, %v298, 0
    %336 = vmatprep.subr.mxu0 0.0
    %337 = vmatpush1.msra.mxu0 0.0
    %338 = vmatprep.subr.mxu0 0.0
    %339 = vmatpush1.msra.mxu0 0.0
    %340 = vmatprep.subr.mxu0 0.0
    %341 = vmatpush1.msra.mxu0 0.0
    %342 = vmatprep.subr.mxu0 0.0
    %343 = vmatpush1.msra.mxu0 0.0
    %344 = vmatprep.subr.mxu0 0.0
    %345 = vmatpush1.msra.mxu0 0.0
    %346 = vmatprep.subr.mxu0 0.0
    %347 = vmatpush1.msra.mxu0 0.0
    %348 = vmatprep.subr.mxu0 0.0
    %349 = vmatpush1.msra.mxu0 0.0
    %350 = vmatprep.subr.mxu0 0.0
    %351 = vmatpush1.msra.mxu0 0.0
    %352 = vmatprep.subr.mxu0 0.0
    %353 = vmatpush1.msra.mxu0 0.0
    %354 = vmatprep.subr.mxu0 0.0
    %355 = vmatpush1.msra.mxu0 0.0
    %356 = vmatprep.subr.mxu0 0.0
    %357 = vmatpush1.msra.mxu0 0.0
    %358 = vmatprep.subr.mxu0 0.0
    %359 = vmatpush1.msra.mxu0 0.0
    %360 = vmatprep.subr.mxu0 0.0
    %361 = vmatpush1.msra.mxu0 %v294
    %362 = vmatprep.subr.mxu0 0.0
    %363 = vmatpush1.msra.mxu0 %v293
    %364 = vmatprep.subr.mxu0 0.0
    %365 = vmatpush1.msra.mxu0 %v292
    %366 = vmatprep.subr.mxu0 0.0
    %367 = vmatpush1.msra.mxu0 %v291
    %368 = vmatprep.subr.mxu0 0.0
    %369 = vmatpush2.msra.mxu0 0.0
    %370 = vmatprep.subr.mxu0 0.0
    %371 = vmatpush2.msra.mxu0 0.0
    %372 = vmatprep.subr.mxu0 0.0
    %373 = vmatpush2.msra.mxu0 0.0
    %374 = vmatprep.subr.mxu0 0.0
    %375 = vmatpush2.msra.mxu0 0.0
    %376 = vmatprep.subr.mxu0 0.0
    %377 = vmatpush2.msra.mxu0 0.0
    %378 = vmatprep.subr.mxu0 0.0
    %379 = vmatpush2.msra.mxu0 0.0
    %380 = vmatprep.subr.mxu0 0.0
    %381 = vmatpush2.msra.mxu0 0.0
    %382 = vmatprep.subr.mxu0 0.0
    %383 = vmatpush2.msra.mxu0 0.0
    %384 = vmatprep.subr.mxu0 0.0
    %385 = vmatpush2.msra.mxu0 0.0
    %386 = vmatprep.subr.mxu0 0.0
    %387 = vmatpush2.msra.mxu0 0.0
    %388 = vmatprep.subr.mxu0 0.0
    %389 = vmatpush2.msra.mxu0 0.0
    %390 = vmatprep.subr.mxu0 0.0
    %391 = vmatpush2.msra.mxu0 0.0
    %392 = vmatprep.subr.mxu0 0.0
    %393 = vmatpush2.msra.mxu0 0.0
    %394 = vmatprep.subr.mxu0 0.0
    %395 = vmatpush2.msra.mxu0 0.0
    %396 = vmatprep.subr.mxu0 0.0
    %397 = vmatpush2.msra.mxu0 0.0
    %398 = vmatprep.subr.mxu0 0.0
    %399 = vmatpush2.msra.mxu0 0.0
    %400 = vmatprep.mubr.f32.mxu0 0.0
    %401 = vmatmul.mubr.f32.gmra.mxu0 %v325
    %v402 = vpop.f32.mrf.mxu0
    %v403 = vadd.f32 %v306, %v402
    %v404 = vpop.f32.mrf.mxu0
    %405 = vmatprep.mubr.f32.mxu0 0.0
    %406 = vmatmul.mubr.f32.gmra.mxu0 %v328
    %v407 = vpop.f32.mrf.mxu0
    %v408 = vadd.f32 %v311, %v407
    %v409 = vpop.f32.mrf.mxu0
    %410 = vmatprep.mubr.f32.mxu0 0.0
    %411 = vmatmul.mubr.f32.gmra.mxu0 %v331
    %v412 = vpop.f32.mrf.mxu0
    %v413 = vadd.f32 %v316, %v412
    %v414 = vpop.f32.mrf.mxu0
    %415 = vmatprep.mubr.f32.mxu0 0.0
    %416 = vmatmul.mubr.f32.gmra.mxu0 %v334
    %v417 = vpop.f32.mrf.mxu0
    %v418 = vadd.f32 %v321, %v417
    %v419 = vpop.f32.mrf.mxu0
    %420 = vdwg.mxu0
    %v421 = vtanh.pop %v403
    %v422 = vtanh.pop %v408
    %v423 = vtanh.pop %v413
    %v424 = vtanh.pop %v418
    %v425 = vld [vmem:[#allocation10] sm:$0xff]
    %v426 = vld [vmem:[%s6] sm:$0xff]
    %428 = vset.pattern.permute.xlu0 0
    %429 = vperm.xlu0 %428, %v426
    %v430 = vpop.permute.xlu0 %429
    %v433 = vsel %vm323, %v425, 0
    %435 = vmatprep.subr.mxu0 0.0
    %436 = vmatpush1.msra.mxu0 0.0
    %437 = vmatprep.subr.mxu0 0.0
    %438 = vmatpush1.msra.mxu0 0.0
    %439 = vmatprep.subr.mxu0 0.0
    %440 = vmatpush1.msra.mxu0 0.0
    %441 = vmatprep.subr.mxu0 0.0
    %442 = vmatpush1.msra.mxu0 0.0
    %443 = vmatprep.subr.mxu0 0.0
    %444 = vmatpush1.msra.mxu0 0.0
    %445 = vmatprep.subr.mxu0 0.0
    %446 = vmatpush1.msra.mxu0 0.0
    %447 = vmatprep.subr.mxu0 0.0
    %448 = vmatpush1.msra.mxu0 0.0
    %449 = vmatprep.subr.mxu0 0.0
    %450 = vmatpush1.msra.mxu0 0.0
    %451 = vmatprep.subr.mxu0 0.0
    %452 = vmatpush1.msra.mxu0 0.0
    %453 = vmatprep.subr.mxu0 0.0
    %454 = vmatpush1.msra.mxu0 0.0
    %455 = vmatprep.subr.mxu0 0.0
    %456 = vmatpush1.msra.mxu0 0.0
    %457 = vmatprep.subr.mxu0 0.0
    %458 = vmatpush1.msra.mxu0 0.0
    %459 = vmatprep.subr.mxu0 0.0
    %460 = vmatpush1.msra.mxu0 %v424
    %461 = vmatprep.subr.mxu0 0.0
    %462 = vmatpush1.msra.mxu0 %v423
    %463 = vmatprep.subr.mxu0 0.0
    %464 = vmatpush1.msra.mxu0 %v422
    %465 = vmatprep.subr.mxu0 0.0
    %466 = vmatpush1.msra.mxu0 %v421
    %467 = vmatprep.subr.mxu0 0.0
    %468 = vmatpush2.msra.mxu0 0.0
    %469 = vmatprep.subr.mxu0 0.0
    %470 = vmatpush2.msra.mxu0 0.0
    %471 = vmatprep.subr.mxu0 0.0
    %472 = vmatpush2.msra.mxu0 0.0
    %473 = vmatprep.subr.mxu0 0.0
    %474 = vmatpush2.msra.mxu0 0.0
    %475 = vmatprep.subr.mxu0 0.0
    %476 = vmatpush2.msra.mxu0 0.0
    %477 = vmatprep.subr.mxu0 0.0
    %478 = vmatpush2.msra.mxu0 0.0
    %479 = vmatprep.subr.mxu0 0.0
    %480 = vmatpush2.msra.mxu0 0.0
    %481 = vmatprep.subr.mxu0 0.0
    %482 = vmatpush2.msra.mxu0 0.0
    %483 = vmatprep.subr.mxu0 0.0
    %484 = vmatpush2.msra.mxu0 0.0
    %485 = vmatprep.subr.mxu0 0.0
    %486 = vmatpush2.msra.mxu0 0.0
    %487 = vmatprep.subr.mxu0 0.0
    %488 = vmatpush2.msra.mxu0 0.0
    %489 = vmatprep.subr.mxu0 0.0
    %490 = vmatpush2.msra.mxu0 0.0
    %491 = vmatprep.subr.mxu0 0.0
    %492 = vmatpush2.msra.mxu0 0.0
    %493 = vmatprep.subr.mxu0 0.0
    %494 = vmatpush2.msra.mxu0 0.0
    %495 = vmatprep.subr.mxu0 0.0
    %496 = vmatpush2.msra.mxu0 0.0
    %497 = vmatprep.subr.mxu0 0.0
    %498 = vmatpush2.msra.mxu0 0.0
    %499 = vmatprep.mubr.f32.mxu0 0.0
    %500 = vmatmul.mubr.f32.gmra.mxu0 %v433
    %v501 = vpop.f32.mrf.mxu0
    %v502 = vadd.f32 %v430, %v501
    %v503 = vpop.f32.mrf.mxu0
    %504 = vdwg.mxu0
    %vm505 = vcmask 64512
    %506 = vst.msk [vmem:[%s7] sm:$0xff] %vm505, %v502
    // Predicated region
    $region54: #{_lambda_.1} parent=1 // pred_check
      _
    $region55: #{_lambda_.1} parent=1 // pred_check_branch
      %508 = sbr.rel (0) target = $region57
    $region56: #{_lambda_.1} parent=1 // pred_region
      _
    $region57: #{_lambda_.1} parent=1 // pred_fallthru
      _
    // Predicated region
    $region58: #{_lambda_.1} parent=1 // pred_check
      _
    $region59: #{_lambda_.1} parent=1 // pred_check_branch
      %510 = sbr.rel (0) target = $region61
    $region60: #{_lambda_.1} parent=1 // pred_region
      _
    $region61: #{_lambda_.1} parent=1 // pred_fallthru
      _
    %511 = vsyncpa [#allocation3], 1
    %512 = vsyncpa [#allocation5], 1
    %513 = vsyncpa [#allocation8], 1
    %514 = vsyncpa [#allocation11], 1

</llo_original>
